<compile_context>
chip_gen: v7x
topology: tpu7x:2x2x1
jax: 0.10.0
libtpu: 0.0.40
codegen_flags: <defaults>
</compile_context>

<pallas_src>
import math

import jax
import jax.numpy as jnp
from jax.experimental import pallas as pl
from jax.experimental.pallas import tpu as pltpu


def _layerscale_kernel(x_ref, g_ref, o_ref):
    # Straight whole-vreg VPU multiply; the (1, td) gamma row broadcasts over
    # the sublane (row) axis of the (tm, td) tile.
    o_ref[...] = x_ref[...] * g_ref[...]


def _chip_tile_params():
    """Return (per-tile byte target, vmem_limit_bytes) tuned per chip."""
    try:
        info = pltpu.get_tpu_info()
        vmem = getattr(info, "vmem_capacity_bytes", None)
        if vmem is not None and vmem <= (96 << 20):
            # v7x-like: only ~64 MiB VMEM/TC but ~2.3x faster HBM, so the
            # ~0.35 us per-step overhead needs bigger tiles to amortize.
            # 8 MiB tile * 4 double-buffered tiles ~= 32 MiB < 40 MiB limit.
            return 8 << 20, 40 << 20
    except Exception:
        pass
    # v5e / v6e: 128 MiB physical VMEM; ~4 MiB tiles already hit ~85% of the
    # HBM roofline, 48 MiB scoped limit leaves plenty of headroom.
    return 4 << 20, 48 << 20


def layer_scale(x: jax.Array, gamma: jax.Array, *,
                block_rows: int | None = None,
                inplace: bool = False,
                tile_target_bytes: int | None = None) -> jax.Array:
    """Pallas LayerScale forward: x * gamma, gamma of shape (D,) broadcast."""
    orig_shape = x.shape
    D = orig_shape[-1]
    assert gamma.shape == (D,), f"gamma must have shape ({D},), got {gamma.shape}"
    out_dtype = x.dtype
    itemsize = jnp.dtype(out_dtype).itemsize

    default_target, vmem_limit = _chip_tile_params()
    tile_target = tile_target_bytes if tile_target_bytes is not None else default_target

    # Flatten leading axes: the op is purely row-wise elementwise.
    x2 = x.reshape(-1, D)
    g = gamma.astype(out_dtype)
    R_orig = x2.shape[0]

    # ---- Lane-dense fold for small channel dims (hardened) -----------------
    # Fold rows into the lane axis so the output last dim is a multiple of 128
    # lanes (no masked vst.msk partial stores). Works for any D < 128 by
    # folding to lcm(D, 128); rows are zero-padded up to a multiple of the
    # fold factor and sliced off after the call.
    lane_d = D
    fold = 1
    if D < 128:
        lcm = (D * 128) // math.gcd(D, 128)
        fold = lcm // D
        pad_rows = (-R_orig) % fold
        if pad_rows:
            x2 = jnp.pad(x2, ((0, pad_rows), (0, 0)))
        R = (R_orig + pad_rows) // fold
        x2 = x2.reshape(R, lcm)
        g = jnp.tile(g, fold)
        lane_d = lcm
    else:
        R = R_orig
    g2 = g.reshape(1, lane_d)

    # ---- Tile sizing: target bytes per tile --------------------------------
    if 8 * lane_d * itemsize > tile_target:
        # Huge-D fallback: tile the channel axis too (second, parallel grid
        # axis) so a tile never blows past the VMEM budget.
        td = max(128, ((tile_target // (8 * itemsize)) // 128) * 128)
        tm = 8 if R >= 8 else R
    else:
        td = lane_d
        rows_target = max(8, ((tile_target // (lane_d * itemsize)) // 8) * 8)
        tm = R if R <= rows_target else rows_target  # multiple of 8 when < R

    # Optional explicit row cap (kept for testing / tuning).
    if block_rows is not None:
        tm = min(tm, max(8, (block_rows // 8) * 8))

    # Guarantee >=2 grid steps when there is enough work, so the parallel grid
    # axis can actually be sharded across v7x's two TensorCores.
    if pl.cdiv(R, tm) * pl.cdiv(lane_d, td) == 1 and R >= 16:
        tm = max(8, ((tm // 2) // 8) * 8)

    grid = (pl.cdiv(R, tm), pl.cdiv(lane_d, td))

    cost = pl.CostEstimate(
        flops=R * lane_d,
        transcendentals=0,
        bytes_accessed=2 * R * lane_d * itemsize + lane_d * itemsize,
    )

    out2 = pl.pallas_call(
        _layerscale_kernel,
        out_shape=jax.ShapeDtypeStruct((R, lane_d), out_dtype),
        grid_spec=pltpu.PrefetchScalarGridSpec(
            num_scalar_prefetch=0,
            grid=grid,
            in_specs=[
                # One lane-dense (tm, td) tile per grid step.
                pl.BlockSpec((tm, td), lambda i, j: (i, j)),
                # Gamma: row-constant block index -> stays VMEM-resident.
                pl.BlockSpec((1, td), lambda i, j: (0, j)),
            ],
            out_specs=pl.BlockSpec((tm, td), lambda i, j: (i, j)),
        ),
        compiler_params=pltpu.CompilerParams(
            dimension_semantics=("parallel", "parallel"),
            vmem_limit_bytes=vmem_limit,
        ),
        cost_estimate=cost,
        input_output_aliases={0: 0} if inplace else {},
    )(x2, g2)

    # Undo fold / padding.
    if fold > 1:
        out2 = out2.reshape(-1, D)[:R_orig]
    return out2.reshape(orig_shape)


if __name__ == "__main__":
    key = jax.random.PRNGKey(0)
    init_values = 1e-5

    # 1) Small transformer-token shape with D < 128 (exercises the lane-dense
    #    fold path: rows folded into a 128-wide lane axis, no padding needed).
    B, N, D = 2, 8, 32
    x = jax.random.normal(key, (B, N, D), dtype=jnp.float32)
    gamma = init_values * jnp.ones((D,), dtype=jnp.float32)
    y = layer_scale(x, gamma)
    jax.block_until_ready(y)
    y_ref = x * gamma.reshape(1, 1, D)
    assert jnp.allclose(y, y_ref, atol=1e-6, rtol=1e-6), "mismatch (folded path)"

    # 2) D = 128 with a forced small row tile -> multi-step row grid with a
    #    partial last block.
    key2 = jax.random.PRNGKey(1)
    B2, N2, D2 = 3, 24, 128   # 72 rows, tile of 64 -> 2 steps, partial last
    x2 = jax.random.normal(key2, (B2, N2, D2), dtype=jnp.float32)
    gamma2 = init_values * jnp.ones((D2,), dtype=jnp.float32)
    y2 = layer_scale(x2, gamma2, block_rows=64)
    jax.block_until_ready(y2)
    y2_ref = x2 * gamma2.reshape(1, 1, D2)
    assert jnp.allclose(y2, y2_ref, atol=1e-6, rtol=1e-6), "mismatch (row-tiled path)"

    # 3) D = 96 (< 128, does NOT divide 128) with a row count that needs
    #    padding -> hardened lcm fold + pad/slice path.
    key3 = jax.random.PRNGKey(2)
    B3, N3, D3 = 2, 5, 96     # 10 rows, fold=4 -> pad to 12 rows
    x3 = jax.random.normal(key3, (B3, N3, D3), dtype=jnp.float32)
    gamma3 = init_values * jnp.ones((D3,), dtype=jnp.float32)
    y3 = layer_scale(x3, gamma3)
    jax.block_until_ready(y3)
    y3_ref = x3 * gamma3.reshape(1, 1, D3)
    assert jnp.allclose(y3, y3_ref, atol=1e-6, rtol=1e-6), "mismatch (lcm-fold path)"

    # 4) Channel-tiling fallback, exercised at small shapes by shrinking the
    #    per-tile byte target -> 2x2 grid over (rows, channels).
    key4 = jax.random.PRNGKey(3)
    B4, N4, D4 = 2, 8, 256
    x4 = jax.random.normal(key4, (B4, N4, D4), dtype=jnp.float32)
    gamma4 = init_values * jnp.ones((D4,), dtype=jnp.float32)
    y4 = layer_scale(x4, gamma4, tile_target_bytes=4096)
    jax.block_until_ready(y4)
    y4_ref = x4 * gamma4.reshape(1, 1, D4)
    assert jnp.allclose(y4, y4_ref, atol=1e-6, rtol=1e-6), "mismatch (D-tiled path)"

    print("KERNEL_OK")
</pallas_src>

<mosaic_0001>
module attributes {stable_mosaic.version = 11 : i64} {
  func.func @_layerscale_kernel(%arg0: i32, %arg1: i32, %arg2: memref<4x128xf32, #tpu.memory_space<vmem>>, %arg3: memref<1x128xf32, #tpu.memory_space<vmem>>, %arg4: memref<4x128xf32, #tpu.memory_space<vmem>>) attributes {dimension_semantics = [#tpu.dimension_semantics<parallel>, #tpu.dimension_semantics<parallel>], iteration_bounds = array<i64: 1, 1>, scalar_prefetch = 0 : i64, scratch_operands = 0 : i64, tpu.core_type = #tpu.core_type<tc>, window_params = [{transform_indices = @transform_0, window_bounds = array<i64: 4, 128>}, {transform_indices = @transform_1, window_bounds = array<i64: 1, 128>}, {transform_indices = @transform_2, window_bounds = array<i64: 4, 128>}]} {
    %c0 = arith.constant 0 : index
    %c0_0 = arith.constant 0 : index
    %0 = vector.load %arg2[%c0, %c0_0] : memref<4x128xf32, #tpu.memory_space<vmem>>, vector<4x128xf32>
    %c0_1 = arith.constant 0 : index
    %c0_2 = arith.constant 0 : index
    %1 = vector.load %arg3[%c0_1, %c0_2] : memref<1x128xf32, #tpu.memory_space<vmem>>, vector<1x128xf32>
    %2 = vector.broadcast %1 : vector<1x128xf32> to vector<4x128xf32>
    %3 = arith.mulf %0, %2 : vector<4x128xf32>
    %c0_3 = arith.constant 0 : index
    %c0_4 = arith.constant 0 : index
    %4 = vector.load %arg4[%c0_3, %c0_4] : memref<4x128xf32, #tpu.memory_space<vmem>>, vector<4x128xf32>
    tpu.vector_store %arg4[%c0_3, %c0_4], %3 {strides = array<i32>} : memref<4x128xf32, #tpu.memory_space<vmem>>, vector<4x128xf32>,
    return
  }
  func.func @transform_0(%arg0: i32, %arg1: i32) -> (i32, i32) {
    %c0_i32 = arith.constant 0 : i32
    return %arg0, %arg1 : i32, i32
  }
  func.func @transform_1(%arg0: i32, %arg1: i32) -> (i32, i32) {
    %c0_i32 = arith.constant 0 : i32
    %c0_i32_0 = arith.constant 0 : i32
    return %c0_i32, %arg1 : i32, i32
  }
  func.func @transform_2(%arg0: i32, %arg1: i32) -> (i32, i32) {
    %c0_i32 = arith.constant 0 : i32
    return %arg0, %arg1 : i32, i32
  }
}

</mosaic_0001>

<llo_original>
// kernel: tpu_custom_call.1
$region0: #{tpu_custom_call.1}
  #allocation0 [shape = 'u32[]', space=smem, size = 0x4, offset = 0x4, fixed_abs, tag = 'smem constant byte address 0x4 - core index']
  #allocation1 [shape = 'u32[144,128]{1,0:T(1,128)}', space=vmem, size = 0x12000, scoped, tag = 'internal scratch']
  %s0 = inlined_call_operand.hbm [shape: f32[4,128], index: 0, kind: input, shape index: {}]
  %s1 = inlined_call_operand.vmem [shape: f32[1,128], index: 1, kind: input, shape index: {}]
  %s2 = inlined_call_operand.hbm [shape: f32[4,128], index: 2, kind: output, shape index: {}]
  %s3 = sld [smem:[#allocation0]]
  $region22: #{tpu_custom_call.1} parent=0
    _
  %s5 = ssub.s32 1, %s3
  %s6 = scalar_select 0, %s5, %s3
  $region1: #{tpu_custom_call.1} parent=0
    #allocation2 [shape = 'u8[2048]{0}', space=vmem, size = 0x800, scoped, tag = 'input window, operand 0, single buffered']
    #allocation3 [shape = 's32[1]{0}', space=sflag, size = 0x4, scoped, tag = 'scoped memory for tpu_custom_call.1']
    #allocation4 [shape = 's32[1]{0}', space=sflag, size = 0x4, scoped, tag = 'scoped memory for tpu_custom_call.1']
    #allocation5 [shape = 'u8[2048]{0}', space=vmem, size = 0x800, scoped, tag = 'output window, operand 0, single buffered']
    %7 = vsyncpa [#allocation3], 0
    %8 = vsyncpa [#allocation4], 0
    // Predicated region
    $region2: #{tpu_custom_call.1} parent=1 // pred_check
      _
    $region3: #{tpu_custom_call.1} parent=1 // pred_check_branch
      %10 = sbr.rel (0) target = $region5
    $region4: #{tpu_custom_call.1} parent=1 // pred_region
      %s12 = ssub.s32 64, 64
      %13 = vsyncadd [#allocation3], %s12
      %s15 = sshll.u32 [#allocation2], 4
      %s16 = int_to_ptr.vmem [resolvable:$true] %s15
      %18 = dma.hbm_to_vmem [thread:$0]  %s0, 64, %s16, [#allocation3]
    $region5: #{tpu_custom_call.1} parent=1 // pred_fallthru
      _
    // Predicated region
    $region6: #{tpu_custom_call.1} parent=1 // pred_check
      _
    $region7: #{tpu_custom_call.1} parent=1 // pred_check_branch
      %20 = sbr.rel (0) target = $region9
    $region8: #{tpu_custom_call.1} parent=1 // pred_region
      _
    $region9: #{tpu_custom_call.1} parent=1 // pred_fallthru
      _
    // Predicated region
    $region10: #{tpu_custom_call.1} parent=1 // pred_check
      _
    $region11: #{tpu_custom_call.1} parent=1 // pred_check_branch
      %22 = sbr.rel (0) target = $region13
    $region12: #{tpu_custom_call.1} parent=1 // pred_region
      %23 = dma.done [#allocation3], 64
    $region13: #{tpu_custom_call.1} parent=1 // pred_fallthru
      _
    %v24 = vld [vmem:[#allocation2] sm:$0xf]
    %v25 = vld [vmem:[%s1] sm:$0x1]
    %v27 = vlaneseq
    %v28 = vshrl.u32 %v27, 7
    %v29 = vsub.s32 0, %v28
    %v30 = vrot.slane %v25, %v29
    %v32 = vmul.f32 %v24, %v30
    %33 = vst [vmem:[#allocation5] sm:$0xf] %v32
    // Predicated region
    $region14: #{tpu_custom_call.1} parent=1 // pred_check
      _
    $region15: #{tpu_custom_call.1} parent=1 // pred_check_branch
      %35 = sbr.rel (0) target = $region17
    $region16: #{tpu_custom_call.1} parent=1 // pred_region
      %s37 = ssub.s32 64, 64
      %38 = vsyncadd [#allocation4], %s37
      %s40 = sshll.u32 [#allocation5], 4
      %s41 = int_to_ptr.vmem [resolvable:$true] %s40
      %43 = dma.vmem_to_hbm [thread:$0]  %s41, 64, %s2, [#allocation4]
    $region17: #{tpu_custom_call.1} parent=1 // pred_fallthru
      _
    // Predicated region
    $region18: #{tpu_custom_call.1} parent=1 // pred_check
      _
    $region19: #{tpu_custom_call.1} parent=1 // pred_check_branch
      %45 = sbr.rel (0) target = $region21
    $region20: #{tpu_custom_call.1} parent=1 // pred_region
      %46 = dma.done [#allocation4], 64
    $region21: #{tpu_custom_call.1} parent=1 // pred_fallthru
      _
    %47 = vsyncpa [#allocation3], 1
    %48 = vsyncpa [#allocation4], 1

</llo_original>
